<compile_context>
chip_gen: v5e
topology: v5e:2x2
jax: 0.10.0
libtpu: 0.0.40
codegen_flags: <defaults>
</compile_context>

<pallas_src>
import functools

import jax
import jax.numpy as jnp
from jax.experimental import pallas as pl
from jax.experimental.pallas import tpu as pltpu

INPUT_SIZE = 784
HIDDEN = 50
NUM_CLASSES = 10

HIDDEN_PAD = 128   # 50  -> 128 lanes (padded cols of W1 / rows of W2 are zero)
OUT_PAD = 128      # 10  -> 128 lanes (padded cols of W2 / b2 are zero)


def _round_up(n: int, m: int) -> int:
    return (n + m - 1) // m * m


def _mlp_kernel(x_ref, w1_ref, b1_ref, w2_ref, b2_ref, o_ref):
    # fc1: bf16 MXU matmul, f32 accumulation; bias + ReLU in f32.
    h = jnp.dot(x_ref[...], w1_ref[...], preferred_element_type=jnp.float32)
    h = jnp.maximum(h + b1_ref[...], 0.0)
    # fc2: downcast activations to bf16 for the second MXU pass.
    out = jnp.dot(h.astype(w2_ref.dtype), w2_ref[...],
                  preferred_element_type=jnp.float32)
    o_ref[...] = (out + b2_ref[...]).astype(o_ref.dtype)


@functools.partial(jax.jit, static_argnames=("block_m",))
def nn_forward(x, w1, b1, w2, b2, *, block_m: int = 1024):
    """Forward pass of the NN module.

    x  : [B, 784] float32
    w1 : [784, 50]  (transpose of nn.Linear fc1.weight), b1 : [1, 50]
    w2 : [50, 10]   (transpose of nn.Linear fc2.weight), b2 : [1, 10]
    returns logits [B, 10] float32
    """
    B = x.shape[0]

    # --- one-time layout plumbing: lane-pad params, cast matmul operands to bf16
    w1p = jnp.zeros((INPUT_SIZE, HIDDEN_PAD), jnp.bfloat16).at[:, :HIDDEN].set(
        w1.astype(jnp.bfloat16))
    b1p = jnp.zeros((1, HIDDEN_PAD), jnp.float32).at[:, :HIDDEN].set(
        b1.astype(jnp.float32))
    w2p = jnp.zeros((HIDDEN_PAD, OUT_PAD), jnp.bfloat16).at[:HIDDEN, :NUM_CLASSES].set(
        w2.astype(jnp.bfloat16))
    b2p = jnp.zeros((1, OUT_PAD), jnp.float32).at[:, :NUM_CLASSES].set(
        b2.astype(jnp.float32))

    # --- pick the batch tile; avoid any batch-pad copy when B fits one tile
    xp = x.astype(jnp.bfloat16)
    if B <= block_m:
        bm = B                      # full-extent batch block (no (8,128) issue)
        padded_b = B
    else:
        bm = block_m
        padded_b = _round_up(B, bm)
        if padded_b != B:
            xp = jnp.pad(xp, ((0, padded_b - B), (0, 0)))

    grid = (padded_b // bm,)

    flops = 2 * padded_b * (INPUT_SIZE * HIDDEN_PAD + HIDDEN_PAD * OUT_PAD)
    bytes_accessed = (xp.size * 2 + w1p.size * 2 + w2p.size * 2
                      + b1p.size * 4 + b2p.size * 4
                      + padded_b * OUT_PAD * 4)

    out_padded = pl.pallas_call(
        _mlp_kernel,
        out_shape=jax.ShapeDtypeStruct((padded_b, OUT_PAD), jnp.float32),
        grid=grid,
        in_specs=[
            pl.BlockSpec((bm, INPUT_SIZE), lambda i: (i, 0)),          # x tile
            pl.BlockSpec((INPUT_SIZE, HIDDEN_PAD), lambda i: (0, 0)),  # W1 (resident)
            pl.BlockSpec((1, HIDDEN_PAD), lambda i: (0, 0)),           # b1 (resident)
            pl.BlockSpec((HIDDEN_PAD, OUT_PAD), lambda i: (0, 0)),     # W2 (resident)
            pl.BlockSpec((1, OUT_PAD), lambda i: (0, 0)),              # b2 (resident)
        ],
        out_specs=pl.BlockSpec((bm, OUT_PAD), lambda i: (i, 0)),
        compiler_params=pltpu.CompilerParams(
            dimension_semantics=("parallel",)),
        cost_estimate=pl.CostEstimate(
            flops=flops, transcendentals=0, bytes_accessed=bytes_accessed),
    )(xp, w1p, b1p, w2p, b2p)

    return out_padded[:B, :NUM_CLASSES]


def init_params(key):
    """Deterministic init matching nn.Linear's default (uniform +/- 1/sqrt(fan_in)).

    Weights stored as [in_features, out_features] (transpose of PyTorch's
    [out, in]) so y = x @ W + b matches F.linear exactly.
    """
    k1, k2, k3, k4 = jax.random.split(key, 4)
    bound1 = 1.0 / (INPUT_SIZE ** 0.5)
    bound2 = 1.0 / (HIDDEN ** 0.5)
    w1 = jax.random.uniform(k1, (INPUT_SIZE, HIDDEN), jnp.float32,
                            minval=-bound1, maxval=bound1)
    b1 = jax.random.uniform(k2, (1, HIDDEN), jnp.float32,
                            minval=-bound1, maxval=bound1)
    w2 = jax.random.uniform(k3, (HIDDEN, NUM_CLASSES), jnp.float32,
                            minval=-bound2, maxval=bound2)
    b2 = jax.random.uniform(k4, (1, NUM_CLASSES), jnp.float32,
                            minval=-bound2, maxval=bound2)
    return w1, b1, w2, b2


if __name__ == "__main__":
    key = jax.random.PRNGKey(0)
    k_x, k_p = jax.random.split(key)

    batch = 2   # tiny test case; kernel uses a full-extent batch block here
    x = jax.random.normal(k_x, (batch, INPUT_SIZE), jnp.float32)
    w1, b1, w2, b2 = init_params(k_p)

    logits = nn_forward(x, w1, b1, w2, b2)
    jax.block_until_ready(logits)
    assert logits.shape == (batch, NUM_CLASSES)

    # Reference 1: identical mixed-precision path (bf16 matmuls, f32 accum)
    xb = x.astype(jnp.bfloat16)
    h_ref = jnp.maximum(
        jnp.dot(xb, w1.astype(jnp.bfloat16),
                preferred_element_type=jnp.float32) + b1, 0.0)
    ref_mixed = jnp.dot(h_ref.astype(jnp.bfloat16), w2.astype(jnp.bfloat16),
                        preferred_element_type=jnp.float32) + b2
    assert jnp.allclose(logits, ref_mixed, atol=1e-3, rtol=1e-3)

    # Reference 2: pure-f32 PyTorch-equivalent forward (loose tol for bf16 inputs)
    ref_f32 = jnp.maximum(x @ w1 + b1, 0.0) @ w2 + b2
    assert jnp.allclose(logits, ref_f32, atol=5e-2, rtol=5e-2)

    print("KERNEL_OK")
</pallas_src>

<mosaic_0001>
module attributes {stable_mosaic.version = 11 : i64} {
  func.func @_mlp_kernel(%arg0: i32, %arg1: memref<2x784xbf16, #tpu.memory_space<vmem>>, %arg2: memref<784x128xbf16, #tpu.memory_space<vmem>>, %arg3: memref<1x128xf32, #tpu.memory_space<vmem>>, %arg4: memref<128x128xbf16, #tpu.memory_space<vmem>>, %arg5: memref<1x128xf32, #tpu.memory_space<vmem>>, %arg6: memref<2x128xf32, #tpu.memory_space<vmem>>) attributes {dimension_semantics = [#tpu.dimension_semantics<parallel>], iteration_bounds = array<i64: 1>, scalar_prefetch = 0 : i64, scratch_operands = 0 : i64, tpu.core_type = #tpu.core_type<tc>, window_params = [{transform_indices = @transform_0, window_bounds = array<i64: 2, 784>}, {pipeline_mode = #tpu.pipeline_mode<synchronous>, transform_indices = @transform_1, window_bounds = array<i64: 784, 128>}, {pipeline_mode = #tpu.pipeline_mode<synchronous>, transform_indices = @transform_2, window_bounds = array<i64: 1, 128>}, {pipeline_mode = #tpu.pipeline_mode<synchronous>, transform_indices = @transform_3, window_bounds = array<i64: 128, 128>}, {pipeline_mode = #tpu.pipeline_mode<synchronous>, transform_indices = @transform_4, window_bounds = array<i64: 1, 128>}, {transform_indices = @transform_5, window_bounds = array<i64: 2, 128>}]} {
    %c0 = arith.constant 0 : index
    %c0_0 = arith.constant 0 : index
    %0 = vector.load %arg1[%c0, %c0_0] : memref<2x784xbf16, #tpu.memory_space<vmem>>, vector<2x784xbf16>
    %c0_1 = arith.constant 0 : index
    %c0_2 = arith.constant 0 : index
    %1 = vector.load %arg2[%c0_1, %c0_2] : memref<784x128xbf16, #tpu.memory_space<vmem>>, vector<784x128xbf16>
    %cst = arith.constant dense<0.000000e+00> : vector<2x128xf32>
    %2 = tpu.matmul %0, %1, %cst {dimension_numbers = #tpu.dot_dimension_numbers<[1], [0], [0], [1], [0, 0, 1, 1], [], []>} : vector<2x784xbf16>, vector<784x128xbf16>, vector<2x128xf32> -> vector<2x128xf32>
    %c0_3 = arith.constant 0 : index
    %c0_4 = arith.constant 0 : index
    %3 = vector.load %arg3[%c0_3, %c0_4] : memref<1x128xf32, #tpu.memory_space<vmem>>, vector<1x128xf32>
    %4 = vector.broadcast %3 : vector<1x128xf32> to vector<2x128xf32>
    %5 = arith.addf %2, %4 : vector<2x128xf32>
    %cst_5 = arith.constant 0.000000e+00 : f32
    %6 = vector.broadcast %cst_5 : f32 to vector<2x128xf32>
    %7 = arith.maximumf %5, %6 : vector<2x128xf32>
    %8 = arith.truncf %7 : vector<2x128xf32> to vector<2x128xbf16>
    %c0_6 = arith.constant 0 : index
    %c0_7 = arith.constant 0 : index
    %9 = vector.load %arg4[%c0_6, %c0_7] : memref<128x128xbf16, #tpu.memory_space<vmem>>, vector<128x128xbf16>
    %cst_8 = arith.constant dense<0.000000e+00> : vector<2x128xf32>
    %10 = tpu.matmul %8, %9, %cst_8 {dimension_numbers = #tpu.dot_dimension_numbers<[1], [0], [0], [1], [0, 0, 1, 1], [], []>} : vector<2x128xbf16>, vector<128x128xbf16>, vector<2x128xf32> -> vector<2x128xf32>
    %c0_9 = arith.constant 0 : index
    %c0_10 = arith.constant 0 : index
    %11 = vector.load %arg5[%c0_9, %c0_10] : memref<1x128xf32, #tpu.memory_space<vmem>>, vector<1x128xf32>
    %12 = vector.broadcast %11 : vector<1x128xf32> to vector<2x128xf32>
    %13 = arith.addf %10, %12 : vector<2x128xf32>
    %c0_11 = arith.constant 0 : index
    %c0_12 = arith.constant 0 : index
    %14 = vector.load %arg6[%c0_11, %c0_12] : memref<2x128xf32, #tpu.memory_space<vmem>>, vector<2x128xf32>
    tpu.vector_store %arg6[%c0_11, %c0_12], %13 {strides = array<i32>} : memref<2x128xf32, #tpu.memory_space<vmem>>, vector<2x128xf32>,
    return
  }
  func.func @transform_0(%arg0: i32) -> (i32, i32) {
    %c0_i32 = arith.constant 0 : i32
    %c0_i32_0 = arith.constant 0 : i32
    return %arg0, %c0_i32 : i32, i32
  }
  func.func @transform_1(%arg0: i32) -> (i32, i32) {
    %c0_i32 = arith.constant 0 : i32
    %c0_i32_0 = arith.constant 0 : i32
    %c0_i32_1 = arith.constant 0 : i32
    return %c0_i32, %c0_i32_0 : i32, i32
  }
  func.func @transform_2(%arg0: i32) -> (i32, i32) {
    %c0_i32 = arith.constant 0 : i32
    %c0_i32_0 = arith.constant 0 : i32
    %c0_i32_1 = arith.constant 0 : i32
    return %c0_i32, %c0_i32_0 : i32, i32
  }
  func.func @transform_3(%arg0: i32) -> (i32, i32) {
    %c0_i32 = arith.constant 0 : i32
    %c0_i32_0 = arith.constant 0 : i32
    %c0_i32_1 = arith.constant 0 : i32
    return %c0_i32, %c0_i32_0 : i32, i32
  }
  func.func @transform_4(%arg0: i32) -> (i32, i32) {
    %c0_i32 = arith.constant 0 : i32
    %c0_i32_0 = arith.constant 0 : i32
    %c0_i32_1 = arith.constant 0 : i32
    return %c0_i32, %c0_i32_0 : i32, i32
  }
  func.func @transform_5(%arg0: i32) -> (i32, i32) {
    %c0_i32 = arith.constant 0 : i32
    %c0_i32_0 = arith.constant 0 : i32
    return %arg0, %c0_i32 : i32, i32
  }
}

</mosaic_0001>

<llo_original>
// kernel: nn_forward.1
$region0: #{nn_forward.1}
  #allocation0 [shape = 'u32[]', space=smem, size = 0x4, offset = 0x4, fixed_abs, tag = 'smem constant byte address 0x4 - core index']
  #allocation1 [shape = 'u32[72,128]{1,0:T(1,128)}', space=vmem, size = 0x9000, scoped, tag = 'internal scratch']
  %s0 = inlined_call_operand.vmem [shape: bf16[2,784], index: 0, kind: input, shape index: {}]
  %s1 = inlined_call_operand.vmem [shape: bf16[784,128], index: 1, kind: input, shape index: {}]
  %s2 = inlined_call_operand.vmem [shape: f32[1,128], index: 2, kind: input, shape index: {}]
  %s3 = inlined_call_operand.vmem [shape: bf16[128,128], index: 3, kind: input, shape index: {}]
  %s4 = inlined_call_operand.vmem [shape: f32[1,128], index: 4, kind: input, shape index: {}]
  %s5 = inlined_call_operand.hbm [shape: f32[2,128], index: 5, kind: output, shape index: {}]
  %s6 = sld [smem:[#allocation0]]
  $region30: #{nn_forward.1} parent=0
    _
  %s8 = ssub.s32 1, %s6
  %s9 = scalar_select 0, %s8, %s6
  $region1: #{nn_forward.1} parent=0
    #allocation2 [shape = 'u8[1024]{0}', space=vmem, size = 0x400, scoped, tag = 'output window, operand 0, single buffered']
    #allocation3 [shape = 's32[1]{0}', space=sflag, size = 0x4, scoped, tag = 'scoped memory for nn_forward.1']
    %10 = vsyncpa [#allocation3], 0
    // Predicated region
    $region2: #{nn_forward.1} parent=1 // pred_check
      _
    $region3: #{nn_forward.1} parent=1 // pred_check_branch
      %12 = sbr.rel (0) target = $region5
    $region4: #{nn_forward.1} parent=1 // pred_region
      _
    $region5: #{nn_forward.1} parent=1 // pred_fallthru
      _
    // Predicated region
    $region6: #{nn_forward.1} parent=1 // pred_check
      _
    $region7: #{nn_forward.1} parent=1 // pred_check_branch
      %14 = sbr.rel (0) target = $region9
    $region8: #{nn_forward.1} parent=1 // pred_region
      _
    $region9: #{nn_forward.1} parent=1 // pred_fallthru
      _
    // Predicated region
    $region10: #{nn_forward.1} parent=1 // pred_check
      _
    $region11: #{nn_forward.1} parent=1 // pred_check_branch
      %16 = sbr.rel (0) target = $region13
    $region12: #{nn_forward.1} parent=1 // pred_region
      _
    $region13: #{nn_forward.1} parent=1 // pred_fallthru
      _
    // Predicated region
    $region14: #{nn_forward.1} parent=1 // pred_check
      _
    $region15: #{nn_forward.1} parent=1 // pred_check_branch
      %18 = sbr.rel (0) target = $region17
    $region16: #{nn_forward.1} parent=1 // pred_region
      _
    $region17: #{nn_forward.1} parent=1 // pred_fallthru
      _
    // Predicated region
    $region18: #{nn_forward.1} parent=1 // pred_check
      _
    $region19: #{nn_forward.1} parent=1 // pred_check_branch
      %20 = sbr.rel (0) target = $region21
    $region20: #{nn_forward.1} parent=1 // pred_region
      _
    $region21: #{nn_forward.1} parent=1 // pred_fallthru
      _
    %v22 = vld [vmem:[%s0] sm:$0x7f]
    %v23 = vld [vmem:[%s1] sm:$0xf]
    %v24 = vld [vmem:[%s1 + $0x4] sm:$0xf]
    %v25 = vld [vmem:[%s1 + $0x8] sm:$0xf]
    %v26 = vld [vmem:[%s1 + $0xc] sm:$0xf]
    %v27 = vld [vmem:[%s1 + $0x10] sm:$0xf]
    %v28 = vld [vmem:[%s1 + $0x14] sm:$0xf]
    %v29 = vld [vmem:[%s1 + $0x18] sm:$0xf]
    %v30 = vld [vmem:[%s1 + $0x1c] sm:$0xf]
    %v31 = vld [vmem:[%s1 + $0x20] sm:$0xf]
    %v32 = vld [vmem:[%s1 + $0x24] sm:$0xf]
    %v33 = vld [vmem:[%s1 + $0x28] sm:$0xf]
    %v34 = vld [vmem:[%s1 + $0x2c] sm:$0xf]
    %v35 = vld [vmem:[%s1 + $0x30] sm:$0xf]
    %v36 = vld [vmem:[%s1 + $0x34] sm:$0xf]
    %v37 = vld [vmem:[%s1 + $0x38] sm:$0xf]
    %v38 = vld [vmem:[%s1 + $0x3c] sm:$0xf]
    %v39 = vld [vmem:[%s1 + $0x40] sm:$0xf]
    %v40 = vld [vmem:[%s1 + $0x44] sm:$0xf]
    %v41 = vld [vmem:[%s1 + $0x48] sm:$0xf]
    %v42 = vld [vmem:[%s1 + $0x4c] sm:$0xf]
    %v43 = vld [vmem:[%s1 + $0x50] sm:$0xf]
    %v44 = vld [vmem:[%s1 + $0x54] sm:$0xf]
    %v45 = vld [vmem:[%s1 + $0x58] sm:$0xf]
    %v46 = vld [vmem:[%s1 + $0x5c] sm:$0xf]
    %v47 = vld [vmem:[%s1 + $0x60] sm:$0xf]
    %v48 = vld [vmem:[%s1 + $0x64] sm:$0xf]
    %v49 = vld [vmem:[%s1 + $0x68] sm:$0xf]
    %v50 = vld [vmem:[%s1 + $0x6c] sm:$0xf]
    %v51 = vld [vmem:[%s1 + $0x70] sm:$0xf]
    %v52 = vld [vmem:[%s1 + $0x74] sm:$0xf]
    %v53 = vld [vmem:[%s1 + $0x78] sm:$0xf]
    %v54 = vld [vmem:[%s1 + $0x7c] sm:$0xf]
    %v55 = vld [vmem:[%s1 + $0x80] sm:$0xf]
    %v56 = vld [vmem:[%s1 + $0x84] sm:$0xf]
    %v57 = vld [vmem:[%s1 + $0x88] sm:$0xf]
    %v58 = vld [vmem:[%s1 + $0x8c] sm:$0xf]
    %v59 = vld [vmem:[%s1 + $0x90] sm:$0xf]
    %v60 = vld [vmem:[%s1 + $0x94] sm:$0xf]
    %v61 = vld [vmem:[%s1 + $0x98] sm:$0xf]
    %v62 = vld [vmem:[%s1 + $0x9c] sm:$0xf]
    %v63 = vld [vmem:[%s1 + $0xa0] sm:$0xf]
    %v64 = vld [vmem:[%s1 + $0xa4] sm:$0xf]
    %v65 = vld [vmem:[%s1 + $0xa8] sm:$0xf]
    %v66 = vld [vmem:[%s1 + $0xac] sm:$0xf]
    %v67 = vld [vmem:[%s1 + $0xb0] sm:$0xf]
    %v68 = vld [vmem:[%s1 + $0xb4] sm:$0xf]
    %v69 = vld [vmem:[%s1 + $0xb8] sm:$0xf]
    %v70 = vld [vmem:[%s1 + $0xbc] sm:$0xf]
    %v71 = vld [vmem:[%s1 + $0xc0] sm:$0xf]
    %v72 = vld [vmem:[%s1 + $0xc4] sm:$0xf]
    %v73 = vld [vmem:[%s1 + $0xc8] sm:$0xf]
    %v74 = vld [vmem:[%s1 + $0xcc] sm:$0xf]
    %v75 = vld [vmem:[%s1 + $0xd0] sm:$0xf]
    %v76 = vld [vmem:[%s1 + $0xd4] sm:$0xf]
    %v77 = vld [vmem:[%s1 + $0xd8] sm:$0xf]
    %v78 = vld [vmem:[%s1 + $0xdc] sm:$0xf]
    %v79 = vld [vmem:[%s1 + $0xe0] sm:$0xf]
    %v80 = vld [vmem:[%s1 + $0xe4] sm:$0xf]
    %v81 = vld [vmem:[%s1 + $0xe8] sm:$0xf]
    %v82 = vld [vmem:[%s1 + $0xec] sm:$0xf]
    %v83 = vld [vmem:[%s1 + $0xf0] sm:$0xf]
    %v84 = vld [vmem:[%s1 + $0xf4] sm:$0xf]
    %v85 = vld [vmem:[%s1 + $0xf8] sm:$0xf]
    %v86 = vld [vmem:[%s1 + $0xfc] sm:$0xf]
    %v87 = vld [vmem:[%s1 + $0x100] sm:$0xf]
    %v88 = vld [vmem:[%s1 + $0x104] sm:$0xf]
    %v89 = vld [vmem:[%s1 + $0x108] sm:$0xf]
    %v90 = vld [vmem:[%s1 + $0x10c] sm:$0xf]
    %v91 = vld [vmem:[%s1 + $0x110] sm:$0xf]
    %v92 = vld [vmem:[%s1 + $0x114] sm:$0xf]
    %v93 = vld [vmem:[%s1 + $0x118] sm:$0xf]
    %v94 = vld [vmem:[%s1 + $0x11c] sm:$0xf]
    %v95 = vld [vmem:[%s1 + $0x120] sm:$0xf]
    %v96 = vld [vmem:[%s1 + $0x124] sm:$0xf]
    %v97 = vld [vmem:[%s1 + $0x128] sm:$0xf]
    %v98 = vld [vmem:[%s1 + $0x12c] sm:$0xf]
    %v99 = vld [vmem:[%s1 + $0x130] sm:$0xf]
    %v100 = vld [vmem:[%s1 + $0x134] sm:$0xf]
    %v101 = vld [vmem:[%s1 + $0x138] sm:$0xf]
    %v102 = vld [vmem:[%s1 + $0x13c] sm:$0xf]
    %v103 = vld [vmem:[%s1 + $0x140] sm:$0xf]
    %v104 = vld [vmem:[%s1 + $0x144] sm:$0xf]
    %v105 = vld [vmem:[%s1 + $0x148] sm:$0xf]
    %v106 = vld [vmem:[%s1 + $0x14c] sm:$0xf]
    %v107 = vld [vmem:[%s1 + $0x150] sm:$0xf]
    %v108 = vld [vmem:[%s1 + $0x154] sm:$0xf]
    %v109 = vld [vmem:[%s1 + $0x158] sm:$0xf]
    %v110 = vld [vmem:[%s1 + $0x15c] sm:$0xf]
    %v111 = vld [vmem:[%s1 + $0x160] sm:$0xf]
    %v112 = vld [vmem:[%s1 + $0x164] sm:$0xf]
    %v113 = vld [vmem:[%s1 + $0x168] sm:$0xf]
    %v114 = vld [vmem:[%s1 + $0x16c] sm:$0xf]
    %v115 = vld [vmem:[%s1 + $0x170] sm:$0xf]
    %v116 = vld [vmem:[%s1 + $0x174] sm:$0xf]
    %v117 = vld [vmem:[%s1 + $0x178] sm:$0xf]
    %v118 = vld [vmem:[%s1 + $0x17c] sm:$0xf]
    %v119 = vld [vmem:[%s1 + $0x180] sm:$0xf]
    %v120 = vld [vmem:[%s1 + $0x184] sm:$0xf]
    %v121 = vld [vmem:[%s2] sm:$0x1]
    %v123 = vperm.slane %v121, 0
    %126 = vst [vmem:[#allocation1] ss:$9 sm:$0xff] %v22
    %v127 = vld [vmem:[#allocation1] sm:$0xff]
    %v128 = vld [vmem:[#allocation1 + $0x9] sm:$0xff]
    %v129 = vld [vmem:[#allocation1 + $0x12] sm:$0xff]
    %v130 = vld [vmem:[#allocation1 + $0x1b] sm:$0xff]
    %v131 = vld [vmem:[#allocation1 + $0x24] sm:$0xff]
    %v132 = vld [vmem:[#allocation1 + $0x2d] sm:$0xff]
    %v133 = vld [vmem:[#allocation1 + $0x36] sm:$0xff]
    %v238 = vunpack.c.l.b16 %v23
    %v239 = vunpack.c.l.b16 %v24
    %v240 = vunpack.c.l.b16 %v25
    %v241 = vunpack.c.l.b16 %v26
    %v242 = vunpack.c.l.b16 %v27
    %v243 = vunpack.c.l.b16 %v28
    %v244 = vunpack.c.l.b16 %v29
    %v245 = vunpack.c.l.b16 %v30
    %v246 = vunpack.c.l.b16 %v31
    %v247 = vunpack.c.l.b16 %v32
    %v248 = vunpack.c.l.b16 %v33
    %v249 = vunpack.c.l.b16 %v34
    %v250 = vunpack.c.l.b16 %v35
    %v251 = vunpack.c.l.b16 %v36
    %v252 = vunpack.c.l.b16 %v37
    %v253 = vunpack.c.l.b16 %v38
    %v254 = vunpack.c.l.b16 %v39
    %v255 = vunpack.c.l.b16 %v40
    %v256 = vunpack.c.l.b16 %v41
    %v257 = vunpack.c.l.b16 %v42
    %v258 = vunpack.c.l.b16 %v43
    %v259 = vunpack.c.l.b16 %v44
    %v260 = vunpack.c.l.b16 %v45
    %v261 = vunpack.c.l.b16 %v46
    %v262 = vunpack.c.l.b16 %v47
    %v263 = vunpack.c.l.b16 %v48
    %v264 = vunpack.c.l.b16 %v49
    %v265 = vunpack.c.l.b16 %v50
    %v266 = vunpack.c.l.b16 %v51
    %v267 = vunpack.c.l.b16 %v52
    %v268 = vunpack.c.l.b16 %v53
    %v269 = vunpack.c.l.b16 %v54
    %v270 = vunpack.c.l.b16 %v55
    %v271 = vunpack.c.l.b16 %v56
    %v272 = vunpack.c.l.b16 %v57
    %v273 = vunpack.c.l.b16 %v58
    %v274 = vunpack.c.l.b16 %v59
    %v275 = vunpack.c.l.b16 %v60
    %v276 = vunpack.c.l.b16 %v61
    %v277 = vunpack.c.l.b16 %v62
    %v278 = vunpack.c.l.b16 %v63
    %v279 = vunpack.c.l.b16 %v64
    %v280 = vunpack.c.l.b16 %v65
    %v281 = vunpack.c.l.b16 %v66
    %v282 = vunpack.c.l.b16 %v67
    %v283 = vunpack.c.l.b16 %v68
    %v284 = vunpack.c.l.b16 %v69
    %v285 = vunpack.c.l.b16 %v70
    %v286 = vunpack.c.l.b16 %v71
    %v287 = vunpack.c.l.b16 %v72
    %v288 = vunpack.c.l.b16 %v73
    %v289 = vunpack.c.l.b16 %v74
    %v290 = vunpack.c.l.b16 %v75
    %v291 = vunpack.c.l.b16 %v76
    %v292 = vunpack.c.l.b16 %v77
    %v293 = vunpack.c.l.b16 %v78
    %v294 = vunpack.c.l.b16 %v79
    %v295 = vunpack.c.l.b16 %v80
    %v296 = vunpack.c.l.b16 %v81
    %v297 = vunpack.c.l.b16 %v82
    %v298 = vunpack.c.l.b16 %v83
    %v299 = vunpack.c.l.b16 %v84
    %v300 = vunpack.c.l.b16 %v85
    %v301 = vunpack.c.l.b16 %v86
    %v302 = vunpack.c.l.b16 %v87
    %v303 = vunpack.c.l.b16 %v88
    %v304 = vunpack.c.l.b16 %v89
    %v305 = vunpack.c.l.b16 %v90
    %v306 = vunpack.c.l.b16 %v91
    %v307 = vunpack.c.l.b16 %v92
    %v308 = vunpack.c.l.b16 %v93
    %v309 = vunpack.c.l.b16 %v94
    %v310 = vunpack.c.l.b16 %v95
    %v311 = vunpack.c.l.b16 %v96
    %v312 = vunpack.c.l.b16 %v97
    %v313 = vunpack.c.l.b16 %v98
    %v314 = vunpack.c.l.b16 %v99
    %v315 = vunpack.c.l.b16 %v100
    %v316 = vunpack.c.l.b16 %v101
    %v317 = vunpack.c.l.b16 %v102
    %v318 = vunpack.c.l.b16 %v103
    %v319 = vunpack.c.l.b16 %v104
    %v320 = vunpack.c.l.b16 %v105
    %v321 = vunpack.c.l.b16 %v106
    %v322 = vunpack.c.l.b16 %v107
    %v323 = vunpack.c.l.b16 %v108
    %v324 = vunpack.c.l.b16 %v109
    %v325 = vunpack.c.l.b16 %v110
    %v326 = vunpack.c.l.b16 %v111
    %v327 = vunpack.c.l.b16 %v112
    %v328 = vunpack.c.l.b16 %v113
    %v329 = vunpack.c.l.b16 %v114
    %v330 = vunpack.c.l.b16 %v115
    %v331 = vunpack.c.l.b16 %v116
    %v332 = vunpack.c.l.b16 %v117
    %v333 = vunpack.c.l.b16 %v118
    %v334 = vunpack.c.l.b16 %v119
    %v335 = vunpack.c.l.b16 %v120
    %v336 = vpack.c.b16 %v239, %v238
    %v337 = vpack.c.b16 %v241, %v240
    %v338 = vpack.c.b16 %v243, %v242
    %v339 = vpack.c.b16 %v245, %v244
    %v340 = vpack.c.b16 %v247, %v246
    %v341 = vpack.c.b16 %v249, %v248
    %v342 = vpack.c.b16 %v251, %v250
    %v343 = vpack.c.b16 %v253, %v252
    %v344 = vpack.c.b16 %v255, %v254
    %v345 = vpack.c.b16 %v257, %v256
    %v346 = vpack.c.b16 %v259, %v258
    %v347 = vpack.c.b16 %v261, %v260
    %v348 = vpack.c.b16 %v263, %v262
    %v349 = vpack.c.b16 %v265, %v264
    %v350 = vpack.c.b16 %v267, %v266
    %v351 = vpack.c.b16 %v269, %v268
    %v352 = vpack.c.b16 %v271, %v270
    %v353 = vpack.c.b16 %v273, %v272
    %v354 = vpack.c.b16 %v275, %v274
    %v355 = vpack.c.b16 %v277, %v276
    %v356 = vpack.c.b16 %v279, %v278
    %v357 = vpack.c.b16 %v281, %v280
    %v358 = vpack.c.b16 %v283, %v282
    %v359 = vpack.c.b16 %v285, %v284
    %v360 = vpack.c.b16 %v287, %v286
    %v361 = vpack.c.b16 %v289, %v288
    %v362 = vpack.c.b16 %v291, %v290
    %v363 = vpack.c.b16 %v293, %v292
    %v364 = vpack.c.b16 %v295, %v294
    %v365 = vpack.c.b16 %v297, %v296
    %v366 = vpack.c.b16 %v299, %v298
    %v367 = vpack.c.b16 %v301, %v300
    %v368 = vpack.c.b16 %v303, %v302
    %v369 = vpack.c.b16 %v305, %v304
    %v370 = vpack.c.b16 %v307, %v306
    %v371 = vpack.c.b16 %v309, %v308
    %v372 = vpack.c.b16 %v311, %v310
    %v373 = vpack.c.b16 %v313, %v312
    %v374 = vpack.c.b16 %v315, %v314
    %v375 = vpack.c.b16 %v317, %v316
    %v376 = vpack.c.b16 %v319, %v318
    %v377 = vpack.c.b16 %v321, %v320
    %v378 = vpack.c.b16 %v323, %v322
    %v379 = vpack.c.b16 %v325, %v324
    %v380 = vpack.c.b16 %v327, %v326
    %v381 = vpack.c.b16 %v329, %v328
    %v382 = vpack.c.b16 %v331, %v330
    %v383 = vpack.c.b16 %v333, %v332
    %v384 = vpack.c.b16 %v335, %v334
    %vm434 = vcmask 130048
    %v435 = vsel %vm434, %v133, 0
    %437 = vmatpush.bf16.msra.mxu0 %v343
    %438 = vmatpush.bf16.msra.mxu0 %v342
    %439 = vmatpush.bf16.msra.mxu0 %v341
    %440 = vmatpush.bf16.msra.mxu0 %v340
    %441 = vmatpush.bf16.msra.mxu0 %v339
    %442 = vmatpush.bf16.msra.mxu0 %v338
    %443 = vmatpush.bf16.msra.mxu0 %v337
    %444 = vmatpush.bf16.msra.mxu0 %v336
    %445 = vmatmul.bf16.gmra.mxu0 %v127
    %v446 = vpop.f32.mrf.mxu0
    %v447 = vadd.f32 %v123, %v446
    %v448 = vpop.f32.mrf.mxu0
    %449 = vdwg.mxu0
    %450 = vmatpush.bf16.msra.mxu0 %v351
    %451 = vmatpush.bf16.msra.mxu0 %v350
    %452 = vmatpush.bf16.msra.mxu0 %v349
    %453 = vmatpush.bf16.msra.mxu0 %v348
    %454 = vmatpush.bf16.msra.mxu0 %v347
    %455 = vmatpush.bf16.msra.mxu0 %v346
    %456 = vmatpush.bf16.msra.mxu0 %v345
    %457 = vmatpush.bf16.msra.mxu0 %v344
    %458 = vmatmul.bf16.gmra.mxu0 %v128
    %v459 = vpop.f32.mrf.mxu0
    %v460 = vadd.f32 %v447, %v459
    %v461 = vpop.f32.mrf.mxu0
    %462 = vdwg.mxu0
    %463 = vmatpush.bf16.msra.mxu0 %v359
    %464 = vmatpush.bf16.msra.mxu0 %v358
    %465 = vmatpush.bf16.msra.mxu0 %v357
    %466 = vmatpush.bf16.msra.mxu0 %v356
    %467 = vmatpush.bf16.msra.mxu0 %v355
    %468 = vmatpush.bf16.msra.mxu0 %v354
    %469 = vmatpush.bf16.msra.mxu0 %v353
    %470 = vmatpush.bf16.msra.mxu0 %v352
    %471 = vmatmul.bf16.gmra.mxu0 %v129
    %v472 = vpop.f32.mrf.mxu0
    %v473 = vadd.f32 %v460, %v472
    %v474 = vpop.f32.mrf.mxu0
    %475 = vdwg.mxu0
    %476 = vmatpush.bf16.msra.mxu0 %v367
    %477 = vmatpush.bf16.msra.mxu0 %v366
    %478 = vmatpush.bf16.msra.mxu0 %v365
    %479 = vmatpush.bf16.msra.mxu0 %v364
    %480 = vmatpush.bf16.msra.mxu0 %v363
    %481 = vmatpush.bf16.msra.mxu0 %v362
    %482 = vmatpush.bf16.msra.mxu0 %v361
    %483 = vmatpush.bf16.msra.mxu0 %v360
    %484 = vmatmul.bf16.gmra.mxu0 %v130
    %v485 = vpop.f32.mrf.mxu0
    %v486 = vadd.f32 %v473, %v485
    %v487 = vpop.f32.mrf.mxu0
    %488 = vdwg.mxu0
    %489 = vmatpush.bf16.msra.mxu0 %v375
    %490 = vmatpush.bf16.msra.mxu0 %v374
    %491 = vmatpush.bf16.msra.mxu0 %v373
    %492 = vmatpush.bf16.msra.mxu0 %v372
    %493 = vmatpush.bf16.msra.mxu0 %v371
    %494 = vmatpush.bf16.msra.mxu0 %v370
    %495 = vmatpush.bf16.msra.mxu0 %v369
    %496 = vmatpush.bf16.msra.mxu0 %v368
    %497 = vmatmul.bf16.gmra.mxu0 %v131
    %v498 = vpop.f32.mrf.mxu0
    %v499 = vadd.f32 %v486, %v498
    %v500 = vpop.f32.mrf.mxu0
    %501 = vdwg.mxu0
    %502 = vmatpush.bf16.msra.mxu0 %v383
    %503 = vmatpush.bf16.msra.mxu0 %v382
    %504 = vmatpush.bf16.msra.mxu0 %v381
    %505 = vmatpush.bf16.msra.mxu0 %v380
    %506 = vmatpush.bf16.msra.mxu0 %v379
    %507 = vmatpush.bf16.msra.mxu0 %v378
    %508 = vmatpush.bf16.msra.mxu0 %v377
    %509 = vmatpush.bf16.msra.mxu0 %v376
    %510 = vmatmul.bf16.gmra.mxu0 %v132
    %v511 = vpop.f32.mrf.mxu0
    %v512 = vadd.f32 %v499, %v511
    %v513 = vpop.f32.mrf.mxu0
    %514 = vdwg.mxu0
    %515 = vmatpush.bf16.msra.mxu0 0
    %516 = vmatpush.bf16.msra.mxu0 0
    %517 = vmatpush.bf16.msra.mxu0 0
    %518 = vmatpush.bf16.msra.mxu0 0
    %519 = vmatpush.bf16.msra.mxu0 0
    %520 = vmatpush.bf16.msra.mxu0 0
    %521 = vmatpush.bf16.msra.mxu0 0
    %522 = vmatpush.bf16.msra.mxu0 %v384
    %523 = vmatmul.bf16.gmra.mxu0 %v435
    %v524 = vpop.f32.mrf.mxu0
    %v525 = vadd.f32 %v512, %v524
    %v526 = vpop.f32.mrf.mxu0
    %527 = vdwg.mxu0
    %v528 = vmax.f32 %v525, 0.0
    %v529 = vpack.c.bf16 %v528, %v528
    %v530 = vld [vmem:[%s3] sm:$0xf]
    %v531 = vld [vmem:[%s3 + $0x4] sm:$0xf]
    %v532 = vld [vmem:[%s3 + $0x8] sm:$0xf]
    %v533 = vld [vmem:[%s3 + $0xc] sm:$0xf]
    %v534 = vld [vmem:[%s3 + $0x10] sm:$0xf]
    %v535 = vld [vmem:[%s3 + $0x14] sm:$0xf]
    %v536 = vld [vmem:[%s3 + $0x18] sm:$0xf]
    %v537 = vld [vmem:[%s3 + $0x1c] sm:$0xf]
    %v538 = vld [vmem:[%s3 + $0x20] sm:$0xf]
    %v539 = vld [vmem:[%s3 + $0x24] sm:$0xf]
    %v540 = vld [vmem:[%s3 + $0x28] sm:$0xf]
    %v541 = vld [vmem:[%s3 + $0x2c] sm:$0xf]
    %v542 = vld [vmem:[%s3 + $0x30] sm:$0xf]
    %v543 = vld [vmem:[%s3 + $0x34] sm:$0xf]
    %v544 = vld [vmem:[%s3 + $0x38] sm:$0xf]
    %v545 = vld [vmem:[%s3 + $0x3c] sm:$0xf]
    %v546 = vld [vmem:[%s4] sm:$0x1]
    %v548 = vperm.slane %v546, 0
    %v566 = vunpack.c.l.b16 %v530
    %v567 = vunpack.c.l.b16 %v531
    %v568 = vunpack.c.l.b16 %v532
    %v569 = vunpack.c.l.b16 %v533
    %v570 = vunpack.c.l.b16 %v534
    %v571 = vunpack.c.l.b16 %v535
    %v572 = vunpack.c.l.b16 %v536
    %v573 = vunpack.c.l.b16 %v537
    %v574 = vunpack.c.l.b16 %v538
    %v575 = vunpack.c.l.b16 %v539
    %v576 = vunpack.c.l.b16 %v540
    %v577 = vunpack.c.l.b16 %v541
    %v578 = vunpack.c.l.b16 %v542
    %v579 = vunpack.c.l.b16 %v543
    %v580 = vunpack.c.l.b16 %v544
    %v581 = vunpack.c.l.b16 %v545
    %v582 = vpack.c.b16 %v567, %v566
    %v583 = vpack.c.b16 %v569, %v568
    %v584 = vpack.c.b16 %v571, %v570
    %v585 = vpack.c.b16 %v573, %v572
    %v586 = vpack.c.b16 %v575, %v574
    %v587 = vpack.c.b16 %v577, %v576
    %v588 = vpack.c.b16 %v579, %v578
    %v589 = vpack.c.b16 %v581, %v580
    %598 = vmatpush.bf16.msra.mxu0 %v589
    %599 = vmatpush.bf16.msra.mxu0 %v588
    %600 = vmatpush.bf16.msra.mxu0 %v587
    %601 = vmatpush.bf16.msra.mxu0 %v586
    %602 = vmatpush.bf16.msra.mxu0 %v585
    %603 = vmatpush.bf16.msra.mxu0 %v584
    %604 = vmatpush.bf16.msra.mxu0 %v583
    %605 = vmatpush.bf16.msra.mxu0 %v582
    %606 = vmatmul.bf16.gmra.mxu0 %v529
    %v607 = vpop.f32.mrf.mxu0
    %v608 = vadd.f32 %v548, %v607
    %v609 = vpop.f32.mrf.mxu0
    %610 = vdwg.mxu0
    %611 = vst [vmem:[#allocation2] sm:$0x3] %v608
    // Predicated region
    $region22: #{nn_forward.1} parent=1 // pred_check
      _
    $region23: #{nn_forward.1} parent=1 // pred_check_branch
      %613 = sbr.rel (0) target = $region25
    $region24: #{nn_forward.1} parent=1 // pred_region
      %615 = vsyncadd [#allocation3], 0
      %s617 = sshll.u32 [#allocation2], 4
      %s618 = int_to_ptr.vmem [resolvable:$true] %s617
      %s619 = sshll.u32 %s5, 4
      %s620 = int_to_ptr.hbm [resolvable:$true] %s619
      %622 = dma.vmem_to_hbm [thread:$0]  %s618, 32, %s620, [#allocation3]
    $region25: #{nn_forward.1} parent=1 // pred_fallthru
      _
    // Predicated region
    $region26: #{nn_forward.1} parent=1 // pred_check
      _
    $region27: #{nn_forward.1} parent=1 // pred_check_branch
      %624 = sbr.rel (0) target = $region29
    $region28: #{nn_forward.1} parent=1 // pred_region
      %626 = dma.done [#allocation3], 32
    $region29: #{nn_forward.1} parent=1 // pred_fallthru
      _
    %627 = vsyncpa [#allocation3], 1

</llo_original>
